<compile_context>
chip_gen: v7x
topology: tpu7x:2x2x1
jax: 0.10.0
libtpu: 0.0.40
codegen_flags: <defaults>
</compile_context>

<pallas_src>
import math

import jax
import jax.numpy as jnp
from jax.experimental import pallas as pl
from jax.experimental.pallas import tpu as pltpu

NUM_FREQUENCIES = 6
IN_DIM = (1 + 2 * NUM_FREQUENCIES) * 2   # 26
FILTER_SIZE = 128
OUT_DIM = 3
LANE = 128                               # lane width / padded output columns


def _round_up(n, m):
    return ((n + m - 1) // m) * m


def mlp_kernel(x_ref, w1_ref, b1_ref, w2_ref, b2_ref, w3_ref, b3_ref, o_ref):
    """One (tile_m, IN_DIM) slab of inputs -> (tile_m, LANE) padded outputs."""
    # layer_in + ReLU (f32 accumulation regardless of MXU operand dtype)
    h = jnp.dot(x_ref[...], w1_ref[...], preferred_element_type=jnp.float32)
    h = jnp.maximum(h + b1_ref[...], 0.0)
    # hidden layer + ReLU
    h = jnp.dot(h.astype(w2_ref.dtype), w2_ref[...],
                preferred_element_type=jnp.float32)
    h = jnp.maximum(h + b2_ref[...], 0.0)
    # output layer (padded to LANE columns -> unmasked lane-dense store) + Sigmoid
    y = jnp.dot(h.astype(w3_ref.dtype), w3_ref[...],
                preferred_element_type=jnp.float32)
    y = jax.nn.sigmoid(y + b3_ref[...])
    o_ref[...] = y.astype(o_ref.dtype)


def model_2d_pallas(x, params, *, tile_m=2048, mxu_dtype=jnp.float32):
    """x: (N, 26) float32.  params: dict of weights in (in, out) layout."""
    w1, b1 = params["w1"], params["b1"]
    w2, b2 = params["w2"], params["b2"]
    w3, b3 = params["w3"], params["b3"]

    N, D = x.shape
    assert D == IN_DIM, f"expected {IN_DIM} input features, got {D}"

    # ---- effective tile: as large as possible (amortize per-step overhead),
    # never larger than the lane-rounded batch, and split into >= 2 grid steps
    # when the batch allows so "parallel" can shard across v7x's two cores.
    n_lane = _round_up(N, LANE)
    tm = min(_round_up(tile_m, LANE), n_lane)
    if _round_up(N, tm) // tm < 2 and N >= 2 * LANE:
        tm = _round_up(n_lane // 2, LANE)
    n_pad = _round_up(N, tm)
    grid = (n_pad // tm,)

    # ---- pad the batch (padded rows produce garbage that is sliced off)
    if n_pad != N:
        x = jnp.pad(x, ((0, n_pad - N), (0, 0)))

    # ---- lane-dense output: pad last layer from 3 -> LANE output columns
    w3p = jnp.zeros((FILTER_SIZE, LANE), w3.dtype).at[:, :OUT_DIM].set(w3)
    b3p = jnp.zeros((LANE,), b3.dtype).at[:OUT_DIM].set(b3)

    # ---- optional bf16 MXU operands; elementwise math stays f32
    x_in = x.astype(mxu_dtype)
    w1m = w1.astype(mxu_dtype)
    w2m = w2.astype(mxu_dtype)
    w3m = w3p.astype(mxu_dtype)
    b1_2d = b1.reshape(1, -1).astype(jnp.float32)
    b2_2d = b2.reshape(1, -1).astype(jnp.float32)
    b3_2d = b3p.reshape(1, -1).astype(jnp.float32)

    full = lambda shape: pl.BlockSpec(shape, lambda i: (0, 0))

    # ---- scoped-VMEM budget: double-buffered x / output tiles scale with tm,
    # weights (~0.3-0.6 MiB double-buffered) are resident, plus f32 temps.
    bpe = jnp.dtype(mxu_dtype).itemsize
    budget = (
        2 * tm * LANE * bpe                                   # x tile (26 lanes pad to 128)
        + 2 * tm * LANE * 4                                   # padded f32 output tile
        + 2 * (32 * LANE + 2 * LANE * LANE + 8 * LANE) * bpe  # weights / biases
        + 3 * tm * FILTER_SIZE * 4                            # f32 intermediates
    )
    vmem_limit = int(min(max(budget * 1.5 + (1 << 20), 16 * 1024 * 1024),
                         40 * 1024 * 1024))

    out = pl.pallas_call(
        mlp_kernel,
        out_shape=jax.ShapeDtypeStruct((n_pad, LANE), jnp.float32),
        grid_spec=pltpu.PrefetchScalarGridSpec(
            num_scalar_prefetch=0,
            grid=grid,
            in_specs=[
                pl.BlockSpec((tm, IN_DIM), lambda i: (i, 0)),   # x tile
                full((IN_DIM, FILTER_SIZE)),                    # w1 (resident)
                full((1, FILTER_SIZE)),                         # b1
                full((FILTER_SIZE, FILTER_SIZE)),               # w2
                full((1, FILTER_SIZE)),                         # b2
                full((FILTER_SIZE, LANE)),                      # w3 (padded)
                full((1, LANE)),                                # b3 (padded)
            ],
            out_specs=pl.BlockSpec((tm, LANE), lambda i: (i, 0)),
        ),
        compiler_params=pltpu.CompilerParams(
            dimension_semantics=("parallel",),
            vmem_limit_bytes=vmem_limit,
        ),
    )(x_in, w1m, b1_2d, w2m, b2_2d, w3m, b3_2d)

    return out[:N, :OUT_DIM]


def init_params(key):
    """Deterministic init mimicking PyTorch nn.Linear default U(-1/sqrt(fan_in), ...)."""
    def linear(key, fan_in, fan_out):
        kw, kb = jax.random.split(key)
        bound = 1.0 / math.sqrt(fan_in)
        w = jax.random.uniform(kw, (fan_in, fan_out), jnp.float32, -bound, bound)
        b = jax.random.uniform(kb, (fan_out,), jnp.float32, -bound, bound)
        return w, b

    k1, k2, k3 = jax.random.split(key, 3)
    w1, b1 = linear(k1, IN_DIM, FILTER_SIZE)
    w2, b2 = linear(k2, FILTER_SIZE, FILTER_SIZE)
    w3, b3 = linear(k3, FILTER_SIZE, OUT_DIM)
    return {"w1": w1, "b1": b1, "w2": w2, "b2": b2, "w3": w3, "b3": b3}


def model_2d_ref(x, p):
    h = jax.nn.relu(x @ p["w1"] + p["b1"])
    h = jax.nn.relu(h @ p["w2"] + p["b2"])
    return jax.nn.sigmoid(h @ p["w3"] + p["b3"])


if __name__ == "__main__":
    key = jax.random.PRNGKey(0)
    kp, kx = jax.random.split(key)
    params = init_params(kp)

    # Small example batch of positionally-encoded 2D coordinates: (256, 26)
    x = jax.random.normal(kx, (256, IN_DIM), jnp.float32)
    ref = model_2d_ref(x, params)

    # f32 path — matches the PyTorch module's numerics.
    out_f32 = jax.block_until_ready(model_2d_pallas(x, params))
    assert out_f32.shape == (256, OUT_DIM)
    assert jnp.allclose(out_f32, ref, atol=1e-5, rtol=1e-5), "f32 mismatch vs reference"

    # bf16-MXU fast path (v6e/v7x) — f32 accumulation, looser tolerance.
    out_bf16 = jax.block_until_ready(
        model_2d_pallas(x, params, mxu_dtype=jnp.bfloat16))
    assert out_bf16.shape == (256, OUT_DIM)
    assert float(jnp.max(jnp.abs(out_bf16 - ref))) < 5e-2, "bf16 mismatch vs reference"

    print("KERNEL_OK")
</pallas_src>

<mosaic_0001>
module attributes {stable_mosaic.version = 11 : i64} {
  func.func @mlp_kernel(%arg0: i32, %arg1: memref<128x26xf32, #tpu.memory_space<vmem>>, %arg2: memref<26x128xf32, #tpu.memory_space<vmem>>, %arg3: memref<1x128xf32, #tpu.memory_space<vmem>>, %arg4: memref<128x128xf32, #tpu.memory_space<vmem>>, %arg5: memref<1x128xf32, #tpu.memory_space<vmem>>, %arg6: memref<128x128xf32, #tpu.memory_space<vmem>>, %arg7: memref<1x128xf32, #tpu.memory_space<vmem>>, %arg8: memref<128x128xf32, #tpu.memory_space<vmem>>) attributes {dimension_semantics = [#tpu.dimension_semantics<parallel>], iteration_bounds = array<i64: 2>, scalar_prefetch = 0 : i64, scratch_operands = 0 : i64, tpu.core_type = #tpu.core_type<tc>, window_params = [{transform_indices = @transform_0, window_bounds = array<i64: 128, 26>}, {pipeline_mode = #tpu.pipeline_mode<synchronous>, transform_indices = @transform_1, window_bounds = array<i64: 26, 128>}, {pipeline_mode = #tpu.pipeline_mode<synchronous>, transform_indices = @transform_2, window_bounds = array<i64: 1, 128>}, {pipeline_mode = #tpu.pipeline_mode<synchronous>, transform_indices = @transform_3, window_bounds = array<i64: 128, 128>}, {pipeline_mode = #tpu.pipeline_mode<synchronous>, transform_indices = @transform_4, window_bounds = array<i64: 1, 128>}, {pipeline_mode = #tpu.pipeline_mode<synchronous>, transform_indices = @transform_5, window_bounds = array<i64: 128, 128>}, {pipeline_mode = #tpu.pipeline_mode<synchronous>, transform_indices = @transform_6, window_bounds = array<i64: 1, 128>}, {transform_indices = @transform_7, window_bounds = array<i64: 128, 128>}]} {
    %c0 = arith.constant 0 : index
    %c0_0 = arith.constant 0 : index
    %0 = vector.load %arg1[%c0, %c0_0] : memref<128x26xf32, #tpu.memory_space<vmem>>, vector<128x26xf32>
    %c0_1 = arith.constant 0 : index
    %c0_2 = arith.constant 0 : index
    %1 = vector.load %arg2[%c0_1, %c0_2] : memref<26x128xf32, #tpu.memory_space<vmem>>, vector<26x128xf32>
    %cst = arith.constant dense<0.000000e+00> : vector<128x128xf32>
    %2 = tpu.matmul %0, %1, %cst {dimension_numbers = #tpu.dot_dimension_numbers<[1], [0], [0], [1], [0, 0, 1, 1], [], []>} : vector<128x26xf32>, vector<26x128xf32>, vector<128x128xf32> -> vector<128x128xf32>
    %c0_3 = arith.constant 0 : index
    %c0_4 = arith.constant 0 : index
    %3 = vector.load %arg3[%c0_3, %c0_4] : memref<1x128xf32, #tpu.memory_space<vmem>>, vector<1x128xf32>
    %4 = vector.broadcast %3 : vector<1x128xf32> to vector<128x128xf32>
    %5 = arith.addf %2, %4 : vector<128x128xf32>
    %cst_5 = arith.constant 0.000000e+00 : f32
    %6 = vector.broadcast %cst_5 : f32 to vector<128x128xf32>
    %7 = arith.maximumf %5, %6 : vector<128x128xf32>
    %c0_6 = arith.constant 0 : index
    %c0_7 = arith.constant 0 : index
    %8 = vector.load %arg4[%c0_6, %c0_7] : memref<128x128xf32, #tpu.memory_space<vmem>>, vector<128x128xf32>
    %cst_8 = arith.constant dense<0.000000e+00> : vector<128x128xf32>
    %9 = tpu.matmul %7, %8, %cst_8 {dimension_numbers = #tpu.dot_dimension_numbers<[1], [0], [0], [1], [0, 0, 1, 1], [], []>} : vector<128x128xf32>, vector<128x128xf32>, vector<128x128xf32> -> vector<128x128xf32>
    %c0_9 = arith.constant 0 : index
    %c0_10 = arith.constant 0 : index
    %10 = vector.load %arg5[%c0_9, %c0_10] : memref<1x128xf32, #tpu.memory_space<vmem>>, vector<1x128xf32>
    %11 = vector.broadcast %10 : vector<1x128xf32> to vector<128x128xf32>
    %12 = arith.addf %9, %11 : vector<128x128xf32>
    %cst_11 = arith.constant 0.000000e+00 : f32
    %13 = vector.broadcast %cst_11 : f32 to vector<128x128xf32>
    %14 = arith.maximumf %12, %13 : vector<128x128xf32>
    %c0_12 = arith.constant 0 : index
    %c0_13 = arith.constant 0 : index
    %15 = vector.load %arg6[%c0_12, %c0_13] : memref<128x128xf32, #tpu.memory_space<vmem>>, vector<128x128xf32>
    %cst_14 = arith.constant dense<0.000000e+00> : vector<128x128xf32>
    %16 = tpu.matmul %14, %15, %cst_14 {dimension_numbers = #tpu.dot_dimension_numbers<[1], [0], [0], [1], [0, 0, 1, 1], [], []>} : vector<128x128xf32>, vector<128x128xf32>, vector<128x128xf32> -> vector<128x128xf32>
    %c0_15 = arith.constant 0 : index
    %c0_16 = arith.constant 0 : index
    %17 = vector.load %arg7[%c0_15, %c0_16] : memref<1x128xf32, #tpu.memory_space<vmem>>, vector<1x128xf32>
    %18 = vector.broadcast %17 : vector<1x128xf32> to vector<128x128xf32>
    %19 = arith.addf %16, %18 : vector<128x128xf32>
    %20 = arith.negf %19 : vector<128x128xf32>
    %21 = math.exp %20 : vector<128x128xf32>
    %cst_17 = arith.constant 1.000000e+00 : f32
    %22 = vector.broadcast %cst_17 : f32 to vector<128x128xf32>
    %23 = arith.addf %22, %21 : vector<128x128xf32>
    %24 = arith.divf %22, %23 : vector<128x128xf32>
    %c0_18 = arith.constant 0 : index
    %c0_19 = arith.constant 0 : index
    %25 = vector.load %arg8[%c0_18, %c0_19] : memref<128x128xf32, #tpu.memory_space<vmem>>, vector<128x128xf32>
    tpu.vector_store %arg8[%c0_18, %c0_19], %24 {strides = array<i32>} : memref<128x128xf32, #tpu.memory_space<vmem>>, vector<128x128xf32>,
    return
  }
  func.func @transform_0(%arg0: i32) -> (i32, i32) {
    %c0_i32 = arith.constant 0 : i32
    %c0_i32_0 = arith.constant 0 : i32
    return %arg0, %c0_i32 : i32, i32
  }
  func.func @transform_1(%arg0: i32) -> (i32, i32) {
    %c0_i32 = arith.constant 0 : i32
    %c0_i32_0 = arith.constant 0 : i32
    %c0_i32_1 = arith.constant 0 : i32
    return %c0_i32, %c0_i32_0 : i32, i32
  }
  func.func @transform_2(%arg0: i32) -> (i32, i32) {
    %c0_i32 = arith.constant 0 : i32
    %c0_i32_0 = arith.constant 0 : i32
    %c0_i32_1 = arith.constant 0 : i32
    return %c0_i32, %c0_i32_0 : i32, i32
  }
  func.func @transform_3(%arg0: i32) -> (i32, i32) {
    %c0_i32 = arith.constant 0 : i32
    %c0_i32_0 = arith.constant 0 : i32
    %c0_i32_1 = arith.constant 0 : i32
    return %c0_i32, %c0_i32_0 : i32, i32
  }
  func.func @transform_4(%arg0: i32) -> (i32, i32) {
    %c0_i32 = arith.constant 0 : i32
    %c0_i32_0 = arith.constant 0 : i32
    %c0_i32_1 = arith.constant 0 : i32
    return %c0_i32, %c0_i32_0 : i32, i32
  }
  func.func @transform_5(%arg0: i32) -> (i32, i32) {
    %c0_i32 = arith.constant 0 : i32
    %c0_i32_0 = arith.constant 0 : i32
    %c0_i32_1 = arith.constant 0 : i32
    return %c0_i32, %c0_i32_0 : i32, i32
  }
  func.func @transform_6(%arg0: i32) -> (i32, i32) {
    %c0_i32 = arith.constant 0 : i32
    %c0_i32_0 = arith.constant 0 : i32
    %c0_i32_1 = arith.constant 0 : i32
    return %c0_i32, %c0_i32_0 : i32, i32
  }
  func.func @transform_7(%arg0: i32) -> (i32, i32) {
    %c0_i32 = arith.constant 0 : i32
    %c0_i32_0 = arith.constant 0 : i32
    return %arg0, %c0_i32 : i32, i32
  }
}

</mosaic_0001>

<llo_original>
// kernel: tpu_custom_call.1
$region0: #{tpu_custom_call.1}
  #allocation0 [shape = 'u32[]', space=smem, size = 0x4, offset = 0x4, fixed_abs, tag = 'smem constant byte address 0x4 - core index']
  #allocation1 [shape = 'u32[144,128]{1,0:T(1,128)}', space=vmem, size = 0x12000, scoped, tag = 'internal scratch']
  %s0 = inlined_call_operand.vmem [shape: f32[256,26], index: 0, kind: input, shape index: {}]
  %s1 = inlined_call_operand.vmem [shape: f32[26,128], index: 1, kind: input, shape index: {}]
  %s2 = inlined_call_operand.vmem [shape: f32[1,128], index: 2, kind: input, shape index: {}]
  %s3 = inlined_call_operand.vmem [shape: f32[128,128], index: 3, kind: input, shape index: {}]
  %s4 = inlined_call_operand.vmem [shape: f32[1,128], index: 4, kind: input, shape index: {}]
  %s5 = inlined_call_operand.vmem [shape: f32[128,128], index: 5, kind: input, shape index: {}]
  %s6 = inlined_call_operand.vmem [shape: f32[1,128], index: 6, kind: input, shape index: {}]
  %s7 = inlined_call_operand.hbm [shape: f32[256,128], index: 7, kind: output, shape index: {}]
  %s8 = sld [smem:[#allocation0]]
  $region61: #{tpu_custom_call.1} parent=0
    _
  %s10 = ssub.s32 1, %s8
  %s11 = scalar_select 0, %s10, %s8
  $region1: #{tpu_custom_call.1} parent=0
    #allocation2 [shape = 'u8[131072]{0}', space=vmem, size = 0x20000, scoped, tag = 'output window, operand 0']
    #allocation3 [shape = 's32[2]{0}', space=sflag, size = 0x8, scoped, tag = 'scoped memory for tpu_custom_call.1']
    %12 = vsyncpa [#allocation3], 0
    %s13 = scalar_lea.sflag [#allocation3], 1
    %14 = vsyncpa %s13, 0
    loop: start=0, step=1, limit=4
    $region2: #{tpu_custom_call.1} parent=1 // loop_pre_header
      _
    $region3: #{tpu_custom_call.1} parent=1 // loop_header
      %s16 = sphi 0, %s20
      %p17 = scmp.ge.s32.totalorder %s16, 4
      %s26 = sphi 0, %s28
      %s29 = sphi 0, %s26
      %s30 = sphi 0, %s29
      %s46 = sphi 0, %s30
      %s50 = sphi 0, %s50
      %s52 = sphi 0, %s50
      %s53 = sphi 0, %s52
      %s67 = sphi 0, %s53
      %s71 = sphi 0, %s71
      %s73 = sphi 0, %s71
      %s74 = sphi 0, %s73
      %s88 = sphi 0, %s74
      %s92 = sphi 0, %s92
      %s94 = sphi 0, %s92
      %s95 = sphi 0, %s94
      %s109 = sphi 0, %s95
      %s113 = sphi 0, %s113
      %s115 = sphi 0, %s113
      %s116 = sphi 0, %s115
      %s130 = sphi 0, %s116
      %s134 = sphi 0, %s134
      %s136 = sphi 0, %s134
      %s137 = sphi 0, %s136
      %s151 = sphi 0, %s137
      %s155 = sphi 0, %s155
      %s157 = sphi 0, %s155
      %s158 = sphi 0, %s157
      %s172 = sphi 0, %s158
      %s178 = sphi 0, %s180
      %s181 = sphi 0, %s178
      %s182 = sphi 0, %s181
      %s198 = sphi 0, %s182
    $region4: #{tpu_custom_call.1} parent=1 // loop_header_branch
      %19 = sbr.rel (%p17) target = $region8
    $region5: #{tpu_custom_call.1} parent=1 // loop_body
      %s21 = ssub.s32 %s16, 1
      %s22 = ssub.s32 %s16, 2
      %s23 = sadd.s32 %s16, 1
      %s24 = ssub.s32 %s16, %s23
      %p25 = scmp.eq.s32.totalorder %s24, 0
      %s27 = sadd.s32 %s26, 1
      %s28 = scalar_select %p25, %s26, %s27
      %p31 = pneg %p25
      %p32 = scmp.eq.s32.totalorder %s16, 1
      %p33 = por %p31, %p32
      %p34 = scmp.ne.s32.totalorder %s26, %s29
      %p35 = scmp.eq.s32.totalorder %s16, 0
      %p36 = por %p34, %p35
      %p37 = scmp.ne.s32.totalorder %s26, %s29
      %p38 = scmp.eq.s32.totalorder %s21, 1
      %p39 = por %p37, %p38
      %p40 = scmp.ne.s32.totalorder %s29, %s30
      %p41 = scmp.eq.s32.totalorder %s21, 0
      %p42 = por %p40, %p41
      %p43 = scmp.ne.s32.totalorder %s29, %s30
      %p44 = scmp.eq.s32.totalorder %s22, 1
      %p45 = por %p43, %p44
      %p47 = scmp.ne.s32.totalorder %s30, %s46
      %p48 = scmp.eq.s32.totalorder %s22, 0
      %p49 = por %p47, %p48
      %s51 = sadd.s32 %s50, 1
      %p54 = scmp.eq.s32.totalorder %s16, 1
      %p55 = scmp.ne.s32.totalorder %s50, %s52
      %p56 = scmp.eq.s32.totalorder %s16, 0
      %p57 = por %p55, %p56
      %p58 = scmp.ne.s32.totalorder %s50, %s52
      %p59 = scmp.eq.s32.totalorder %s21, 1
      %p60 = por %p58, %p59
      %p61 = scmp.ne.s32.totalorder %s52, %s53
      %p62 = scmp.eq.s32.totalorder %s21, 0
      %p63 = por %p61, %p62
      %p64 = scmp.ne.s32.totalorder %s52, %s53
      %p65 = scmp.eq.s32.totalorder %s22, 1
      %p66 = por %p64, %p65
      %p68 = scmp.ne.s32.totalorder %s53, %s67
      %p69 = scmp.eq.s32.totalorder %s22, 0
      %p70 = por %p68, %p69
      %s72 = sadd.s32 %s71, 1
      %p75 = scmp.eq.s32.totalorder %s16, 1
      %p76 = scmp.ne.s32.totalorder %s71, %s73
      %p77 = scmp.eq.s32.totalorder %s16, 0
      %p78 = por %p76, %p77
      %p79 = scmp.ne.s32.totalorder %s71, %s73
      %p80 = scmp.eq.s32.totalorder %s21, 1
      %p81 = por %p79, %p80
      %p82 = scmp.ne.s32.totalorder %s73, %s74
      %p83 = scmp.eq.s32.totalorder %s21, 0
      %p84 = por %p82, %p83
      %p85 = scmp.ne.s32.totalorder %s73, %s74
      %p86 = scmp.eq.s32.totalorder %s22, 1
      %p87 = por %p85, %p86
      %p89 = scmp.ne.s32.totalorder %s74, %s88
      %p90 = scmp.eq.s32.totalorder %s22, 0
      %p91 = por %p89, %p90
      %s93 = sadd.s32 %s92, 1
      %p96 = scmp.eq.s32.totalorder %s16, 1
      %p97 = scmp.ne.s32.totalorder %s92, %s94
      %p98 = scmp.eq.s32.totalorder %s16, 0
      %p99 = por %p97, %p98
      %p100 = scmp.ne.s32.totalorder %s92, %s94
      %p101 = scmp.eq.s32.totalorder %s21, 1
      %p102 = por %p100, %p101
      %p103 = scmp.ne.s32.totalorder %s94, %s95
      %p104 = scmp.eq.s32.totalorder %s21, 0
      %p105 = por %p103, %p104
      %p106 = scmp.ne.s32.totalorder %s94, %s95
      %p107 = scmp.eq.s32.totalorder %s22, 1
      %p108 = por %p106, %p107
      %p110 = scmp.ne.s32.totalorder %s95, %s109
      %p111 = scmp.eq.s32.totalorder %s22, 0
      %p112 = por %p110, %p111
      %s114 = sadd.s32 %s113, 1
      %p117 = scmp.eq.s32.totalorder %s16, 1
      %p118 = scmp.ne.s32.totalorder %s113, %s115
      %p119 = scmp.eq.s32.totalorder %s16, 0
      %p120 = por %p118, %p119
      %p121 = scmp.ne.s32.totalorder %s113, %s115
      %p122 = scmp.eq.s32.totalorder %s21, 1
      %p123 = por %p121, %p122
      %p124 = scmp.ne.s32.totalorder %s115, %s116
      %p125 = scmp.eq.s32.totalorder %s21, 0
      %p126 = por %p124, %p125
      %p127 = scmp.ne.s32.totalorder %s115, %s116
      %p128 = scmp.eq.s32.totalorder %s22, 1
      %p129 = por %p127, %p128
      %p131 = scmp.ne.s32.totalorder %s116, %s130
      %p132 = scmp.eq.s32.totalorder %s22, 0
      %p133 = por %p131, %p132
      %s135 = sadd.s32 %s134, 1
      %p138 = scmp.eq.s32.totalorder %s16, 1
      %p139 = scmp.ne.s32.totalorder %s134, %s136
      %p140 = scmp.eq.s32.totalorder %s16, 0
      %p141 = por %p139, %p140
      %p142 = scmp.ne.s32.totalorder %s134, %s136
      %p143 = scmp.eq.s32.totalorder %s21, 1
      %p144 = por %p142, %p143
      %p145 = scmp.ne.s32.totalorder %s136, %s137
      %p146 = scmp.eq.s32.totalorder %s21, 0
      %p147 = por %p145, %p146
      %p148 = scmp.ne.s32.totalorder %s136, %s137
      %p149 = scmp.eq.s32.totalorder %s22, 1
      %p150 = por %p148, %p149
      %p152 = scmp.ne.s32.totalorder %s137, %s151
      %p153 = scmp.eq.s32.totalorder %s22, 0
      %p154 = por %p152, %p153
      %s156 = sadd.s32 %s155, 1
      %p159 = scmp.eq.s32.totalorder %s16, 1
      %p160 = scmp.ne.s32.totalorder %s155, %s157
      %p161 = scmp.eq.s32.totalorder %s16, 0
      %p162 = por %p160, %p161
      %p163 = scmp.ne.s32.totalorder %s155, %s157
      %p164 = scmp.eq.s32.totalorder %s21, 1
      %p165 = por %p163, %p164
      %p166 = scmp.ne.s32.totalorder %s157, %s158
      %p167 = scmp.eq.s32.totalorder %s21, 0
      %p168 = por %p166, %p167
      %p169 = scmp.ne.s32.totalorder %s157, %s158
      %p170 = scmp.eq.s32.totalorder %s22, 1
      %p171 = por %p169, %p170
      %p173 = scmp.ne.s32.totalorder %s158, %s172
      %p174 = scmp.eq.s32.totalorder %s22, 0
      %p175 = por %p173, %p174
      %s176 = ssub.s32 %s16, %s23
      %p177 = scmp.eq.s32.totalorder %s176, 0
      %s179 = sadd.s32 %s178, 1
      %s180 = scalar_select %p177, %s178, %s179
      %p183 = pneg %p177
      %p184 = scmp.eq.s32.totalorder %s16, 1
      %p185 = por %p183, %p184
      %p186 = scmp.ne.s32.totalorder %s178, %s181
      %p187 = scmp.eq.s32.totalorder %s16, 0
      %p188 = por %p186, %p187
      %p189 = scmp.ne.s32.totalorder %s178, %s181
      %p190 = scmp.eq.s32.totalorder %s21, 1
      %p191 = por %p189, %p190
      %p192 = scmp.ne.s32.totalorder %s181, %s182
      %p193 = scmp.eq.s32.totalorder %s21, 0
      %p194 = por %p192, %p193
      %p195 = scmp.ne.s32.totalorder %s181, %s182
      %p196 = scmp.eq.s32.totalorder %s22, 1
      %p197 = por %p195, %p196
      %p199 = scmp.ne.s32.totalorder %s182, %s198
      %p200 = scmp.eq.s32.totalorder %s22, 0
      %p201 = por %p199, %p200
      %p202 = scmp.le.s32.totalorder 1, %s16
      %p203 = scmp.lt.s32.totalorder %s16, 3
      %p204 = pnand %p202, %p203
      %p205 = pneg %p204
      // Predicated region
      $region9: #{tpu_custom_call.1} parent=5 // pred_check
        _
      $region10: #{tpu_custom_call.1} parent=5 // pred_check_branch
        %207 = sbr.rel (%p204) target = $region12
      $region11: #{tpu_custom_call.1} parent=5 // pred_region
        %s208 = ssub.s32 %s16, 1
        // Predicated region
        $region13: #{tpu_custom_call.1} parent=11 // pred_check
          %p209 = pneg %p63
        $region14: #{tpu_custom_call.1} parent=11 // pred_check_branch
          %211 = sbr.rel (%p209) target = $region16
        $region15: #{tpu_custom_call.1} parent=11 // pred_region
          _
        $region16: #{tpu_custom_call.1} parent=11 // pred_fallthru
          _
        // Predicated region
        $region17: #{tpu_custom_call.1} parent=11 // pred_check
          %p212 = pneg %p84
        $region18: #{tpu_custom_call.1} parent=11 // pred_check_branch
          %214 = sbr.rel (%p212) target = $region20
        $region19: #{tpu_custom_call.1} parent=11 // pred_region
          _
        $region20: #{tpu_custom_call.1} parent=11 // pred_fallthru
          _
        // Predicated region
        $region21: #{tpu_custom_call.1} parent=11 // pred_check
          %p215 = pneg %p105
        $region22: #{tpu_custom_call.1} parent=11 // pred_check_branch
          %217 = sbr.rel (%p215) target = $region24
        $region23: #{tpu_custom_call.1} parent=11 // pred_region
          _
        $region24: #{tpu_custom_call.1} parent=11 // pred_fallthru
          _
        // Predicated region
        $region25: #{tpu_custom_call.1} parent=11 // pred_check
          %p218 = pneg %p126
        $region26: #{tpu_custom_call.1} parent=11 // pred_check_branch
          %220 = sbr.rel (%p218) target = $region28
        $region27: #{tpu_custom_call.1} parent=11 // pred_region
          _
        $region28: #{tpu_custom_call.1} parent=11 // pred_fallthru
          _
        // Predicated region
        $region29: #{tpu_custom_call.1} parent=11 // pred_check
          %p221 = pneg %p147
        $region30: #{tpu_custom_call.1} parent=11 // pred_check_branch
          %223 = sbr.rel (%p221) target = $region32
        $region31: #{tpu_custom_call.1} parent=11 // pred_region
          _
        $region32: #{tpu_custom_call.1} parent=11 // pred_fallthru
          _
        // Predicated region
        $region33: #{tpu_custom_call.1} parent=11 // pred_check
          %p224 = pneg %p168
        $region34: #{tpu_custom_call.1} parent=11 // pred_check_branch
          %226 = sbr.rel (%p224) target = $region36
        $region35: #{tpu_custom_call.1} parent=11 // pred_region
          _
        $region36: #{tpu_custom_call.1} parent=11 // pred_fallthru
          _
      $region12: #{tpu_custom_call.1} parent=5 // pred_fallthru
        _
      %p227 = scmp.lt.s32.totalorder %s16, 2
      // Predicated region
      $region37: #{tpu_custom_call.1} parent=5 // pred_check
        %p228 = pneg %p227
      $region38: #{tpu_custom_call.1} parent=5 // pred_check_branch
        %230 = sbr.rel (%p228) target = $region40
      $region39: #{tpu_custom_call.1} parent=5 // pred_region
        // Predicated region
        $region41: #{tpu_custom_call.1} parent=39 // pred_check
          %p231 = pneg %p36
        $region42: #{tpu_custom_call.1} parent=39 // pred_check_branch
          %233 = sbr.rel (%p231) target = $region44
        $region43: #{tpu_custom_call.1} parent=39 // pred_region
          %s234 = smul.u32 16, %s16
          %p235 = scmp.lt.s32.totalorder %s234, 31
          %s236 = scalar_select %p235, %s234, 31
          %s237 = smul.addr %s236, 8
          %s238 = scalar_lea.vmem %s0, %s237
          %s239 = smul.u32 16, %s16
        $region44: #{tpu_custom_call.1} parent=39 // pred_fallthru
          _
      $region40: #{tpu_custom_call.1} parent=5 // pred_fallthru
        _
      %p240 = scmp.le.s32.totalorder 1, %s16
      %p241 = scmp.lt.s32.totalorder %s16, 3
      %p242 = pnand %p240, %p241
      %p243 = pneg %p242
      // Predicated region
      $region45: #{tpu_custom_call.1} parent=5 // pred_check
        _
      $region46: #{tpu_custom_call.1} parent=5 // pred_check_branch
        %245 = sbr.rel (%p242) target = $region48
      $region47: #{tpu_custom_call.1} parent=5 // pred_region
        %s246 = ssub.s32 %s16, 1
        %s247 = smul.u32 16, %s21
        %p248 = scmp.lt.s32.totalorder %s247, 31
        %s249 = scalar_select %p248, %s247, 31
        %s250 = smul.addr %s249, 8
        %s251 = scalar_lea.vmem %s0, %s250
        %p252 = pneg %p42
        %p253 = pneg %p39
        %p254 = pneg %p63
        %p255 = pneg %p60
        %p256 = pneg %p84
        %p257 = pneg %p81
        %p258 = pneg %p105
        %p259 = pneg %p102
        %p260 = pneg %p126
        %p261 = pneg %p123
        %p262 = pneg %p147
        %p263 = pneg %p144
        %p264 = pneg %p168
        %p265 = pneg %p165
        %p266 = pneg %p194
        %p267 = pneg %p191
        %s268 = sand.u32 %s181, 1
        %s269 = scalar_lea.sflag [#allocation3], %s268
        %s270 = sand.u32 %s181, 1
        %s271 = smul.addr %s270, 128
        %s272 = scalar_lea.vmem [#allocation2], %s271
        %s273 = smul.u32 16, %s21
        %p274 = scmp.lt.s32.totalorder %s273, 31
        %s275 = scalar_select %p274, %s273, 31
        %s276 = smul.addr %s275, 8
        %s277 = scalar_lea.vmem %s0, %s276
        %s278 = smul.u32 16, %s21
        %s279 = smul.u32 16, %s21
        %v280 = vld [vmem:[%s277] sm:$0xff]
        %v281 = vld [vmem:[%s277 + $0x8] sm:$0xff]
        %v282 = vld [vmem:[%s277 + $0x10] sm:$0xff]
        %v283 = vld [vmem:[%s277 + $0x18] sm:$0xff]
        %v284 = vld [vmem:[%s277 + $0x20] sm:$0xff]
        %v285 = vld [vmem:[%s277 + $0x28] sm:$0xff]
        %v286 = vld [vmem:[%s277 + $0x30] sm:$0xff]
        %v287 = vld [vmem:[%s277 + $0x38] sm:$0xff]
        %v288 = vld [vmem:[%s277 + $0x40] sm:$0xff]
        %v289 = vld [vmem:[%s277 + $0x48] sm:$0xff]
        %v290 = vld [vmem:[%s277 + $0x50] sm:$0xff]
        %v291 = vld [vmem:[%s277 + $0x58] sm:$0xff]
        %v292 = vld [vmem:[%s277 + $0x60] sm:$0xff]
        %v293 = vld [vmem:[%s277 + $0x68] sm:$0xff]
        %v294 = vld [vmem:[%s277 + $0x70] sm:$0xff]
        %v295 = vld [vmem:[%s277 + $0x78] sm:$0xff]
        %v296 = vld [vmem:[%s1] sm:$0xff]
        %v297 = vld [vmem:[%s1 + $0x8] sm:$0xff]
        %v298 = vld [vmem:[%s1 + $0x10] sm:$0xff]
        %v299 = vld [vmem:[%s1 + $0x18] sm:$0x3]
        %v300 = vld [vmem:[%s2] sm:$0x1]
        %v302 = vlaneseq
        %v303 = vshrl.u32 %v302, 7
        %v304 = vsub.s32 0, %v303
        %v305 = vrot.slane %v300, %v304
        %vm307 = vcmask 211968
        %v309 = vsel %vm307, %v280, 0
        %v312 = vsel %vm307, %v281, 0
        %v315 = vsel %vm307, %v282, 0
        %v318 = vsel %vm307, %v283, 0
        %v321 = vsel %vm307, %v284, 0
        %v324 = vsel %vm307, %v285, 0
        %v327 = vsel %vm307, %v286, 0
        %v330 = vsel %vm307, %v287, 0
        %v333 = vsel %vm307, %v288, 0
        %v336 = vsel %vm307, %v289, 0
        %v339 = vsel %vm307, %v290, 0
        %v342 = vsel %vm307, %v291, 0
        %v345 = vsel %vm307, %v292, 0
        %v348 = vsel %vm307, %v293, 0
        %v351 = vsel %vm307, %v294, 0
        %v354 = vsel %vm307, %v295, 0
        %vm356 = vcmask 1041408
        %v358 = vsel %vm356, %v299, 0
        %360 = vmatprep.subr.mxu0 0.0
        %361 = vmatpush1.msra.mxu0 %v296
        %362 = vmatprep.subr.mxu0 0.0
        %363 = vmatpush1.msra.mxu0 %v297
        %364 = vmatprep.subr.mxu0 0.0
        %365 = vmatpush1.msra.mxu0 %v298
        %366 = vmatprep.subr.mxu0 0.0
        %367 = vmatpush1.msra.mxu0 %v358
        %368 = vmatprep.subr.mxu0 0.0
        %369 = vmatpush1.msra.mxu0 0.0
        %370 = vmatprep.subr.mxu0 0.0
        %371 = vmatpush1.msra.mxu0 0.0
        %372 = vmatprep.subr.mxu0 0.0
        %373 = vmatpush1.msra.mxu0 0.0
        %374 = vmatprep.subr.mxu0 0.0
        %375 = vmatpush1.msra.mxu0 0.0
        %376 = vmatprep.subr.mxu0 0.0
        %377 = vmatpush1.msra.mxu0 0.0
        %378 = vmatprep.subr.mxu0 0.0
        %379 = vmatpush1.msra.mxu0 0.0
        %380 = vmatprep.subr.mxu0 0.0
        %381 = vmatpush1.msra.mxu0 0.0
        %382 = vmatprep.subr.mxu0 0.0
        %383 = vmatpush1.msra.mxu0 0.0
        %384 = vmatprep.subr.mxu0 0.0
        %385 = vmatpush1.msra.mxu0 0.0
        %386 = vmatprep.subr.mxu0 0.0
        %387 = vmatpush1.msra.mxu0 0.0
        %388 = vmatprep.subr.mxu0 0.0
        %389 = vmatpush1.msra.mxu0 0.0
        %390 = vmatprep.subr.mxu0 0.0
        %391 = vmatpush1.msra.mxu0 0.0
        %392 = vmatprep.subr.mxu0 0.0
        %393 = vmatpush1.msra.mxu0 0.0
        %394 = vmatprep.subr.mxu0 0.0
        %395 = vmatpush1.msra.mxu0 0.0
        %396 = vmatprep.subr.mxu0 0.0
        %397 = vmatpush1.msra.mxu0 0.0
        %398 = vmatprep.subr.mxu0 0.0
        %399 = vmatpush1.msra.mxu0 0.0
        %400 = vmatprep.subr.mxu0 0.0
        %401 = vmatpush1.msra.mxu0 0.0
        %402 = vmatprep.subr.mxu0 0.0
        %403 = vmatpush1.msra.mxu0 0.0
        %404 = vmatprep.subr.mxu0 0.0
        %405 = vmatpush1.msra.mxu0 0.0
        %406 = vmatprep.subr.mxu0 0.0
        %407 = vmatpush1.msra.mxu0 0.0
        %408 = vmatprep.subr.mxu0 0.0
        %409 = vmatpush1.msra.mxu0 0.0
        %410 = vmatprep.subr.mxu0 0.0
        %411 = vmatpush1.msra.mxu0 0.0
        %412 = vmatprep.subr.mxu0 0.0
        %413 = vmatpush1.msra.mxu0 0.0
        %414 = vmatprep.subr.mxu0 0.0
        %415 = vmatpush1.msra.mxu0 0.0
        %416 = vmatprep.subr.mxu0 0.0
        %417 = vmatpush1.msra.mxu0 0.0
        %418 = vmatprep.subr.mxu0 0.0
        %419 = vmatpush1.msra.mxu0 0.0
        %420 = vmatprep.subr.mxu0 0.0
        %421 = vmatpush1.msra.mxu0 0.0
        %422 = vmatprep.subr.mxu0 0.0
        %423 = vmatpush1.msra.mxu0 0.0
        %424 = vmatprep.mubr.f32.mxu0 0.0
        %425 = vmatmul.mubr.f32.gmra.mrb[0].mxu0 %v309
        %v426 = vpop.f32.mrb[0].mxu0
        %v427 = vadd.f32 %v305, %v426
        %v428 = vpop.f32.mrb[0].mxu0
        %429 = vmatprep.mubr.f32.mxu0 0.0
        %430 = vmatmul.mubr.f32.gmra.mrb[0].mxu0 %v312
        %v431 = vpop.f32.mrb[0].mxu0
        %v432 = vadd.f32 %v305, %v431
        %v433 = vpop.f32.mrb[0].mxu0
        %434 = vmatprep.mubr.f32.mxu0 0.0
        %435 = vmatmul.mubr.f32.gmra.mrb[0].mxu0 %v315
        %v436 = vpop.f32.mrb[0].mxu0
        %v437 = vadd.f32 %v305, %v436
        %v438 = vpop.f32.mrb[0].mxu0
        %439 = vmatprep.mubr.f32.mxu0 0.0
        %440 = vmatmul.mubr.f32.gmra.mrb[0].mxu0 %v318
        %v441 = vpop.f32.mrb[0].mxu0
        %v442 = vadd.f32 %v305, %v441
        %v443 = vpop.f32.mrb[0].mxu0
        %444 = vmatprep.mubr.f32.mxu0 0.0
        %445 = vmatmul.mubr.f32.gmra.mrb[0].mxu0 %v321
        %v446 = vpop.f32.mrb[0].mxu0
        %v447 = vadd.f32 %v305, %v446
        %v448 = vpop.f32.mrb[0].mxu0
        %449 = vmatprep.mubr.f32.mxu0 0.0
        %450 = vmatmul.mubr.f32.gmra.mrb[0].mxu0 %v324
        %v451 = vpop.f32.mrb[0].mxu0
        %v452 = vadd.f32 %v305, %v451
        %v453 = vpop.f32.mrb[0].mxu0
        %454 = vmatprep.mubr.f32.mxu0 0.0
        %455 = vmatmul.mubr.f32.gmra.mrb[0].mxu0 %v327
        %v456 = vpop.f32.mrb[0].mxu0
        %v457 = vadd.f32 %v305, %v456
        %v458 = vpop.f32.mrb[0].mxu0
        %459 = vmatprep.mubr.f32.mxu0 0.0
        %460 = vmatmul.mubr.f32.gmra.mrb[0].mxu0 %v330
        %v461 = vpop.f32.mrb[0].mxu0
        %v462 = vadd.f32 %v305, %v461
        %v463 = vpop.f32.mrb[0].mxu0
        %464 = vmatprep.mubr.f32.mxu0 0.0
        %465 = vmatmul.mubr.f32.gmra.mrb[0].mxu0 %v333
        %v466 = vpop.f32.mrb[0].mxu0
        %v467 = vadd.f32 %v305, %v466
        %v468 = vpop.f32.mrb[0].mxu0
        %469 = vmatprep.mubr.f32.mxu0 0.0
        %470 = vmatmul.mubr.f32.gmra.mrb[0].mxu0 %v336
        %v471 = vpop.f32.mrb[0].mxu0
        %v472 = vadd.f32 %v305, %v471
        %v473 = vpop.f32.mrb[0].mxu0
        %474 = vmatprep.mubr.f32.mxu0 0.0
        %475 = vmatmul.mubr.f32.gmra.mrb[0].mxu0 %v339
        %v476 = vpop.f32.mrb[0].mxu0
        %v477 = vadd.f32 %v305, %v476
        %v478 = vpop.f32.mrb[0].mxu0
        %479 = vmatprep.mubr.f32.mxu0 0.0
        %480 = vmatmul.mubr.f32.gmra.mrb[0].mxu0 %v342
        %v481 = vpop.f32.mrb[0].mxu0
        %v482 = vadd.f32 %v305, %v481
        %v483 = vpop.f32.mrb[0].mxu0
        %484 = vmatprep.mubr.f32.mxu0 0.0
        %485 = vmatmul.mubr.f32.gmra.mrb[0].mxu0 %v345
        %v486 = vpop.f32.mrb[0].mxu0
        %v487 = vadd.f32 %v305, %v486
        %v488 = vpop.f32.mrb[0].mxu0
        %489 = vmatprep.mubr.f32.mxu0 0.0
        %490 = vmatmul.mubr.f32.gmra.mrb[0].mxu0 %v348
        %v491 = vpop.f32.mrb[0].mxu0
        %v492 = vadd.f32 %v305, %v491
        %v493 = vpop.f32.mrb[0].mxu0
        %494 = vmatprep.mubr.f32.mxu0 0.0
        %495 = vmatmul.mubr.f32.gmra.mrb[0].mxu0 %v351
        %v496 = vpop.f32.mrb[0].mxu0
        %v497 = vadd.f32 %v305, %v496
        %v498 = vpop.f32.mrb[0].mxu0
        %499 = vmatprep.mubr.f32.mxu0 0.0
        %500 = vmatmul.mubr.f32.gmra.mrb[0].mxu0 %v354
        %v501 = vpop.f32.mrb[0].mxu0
        %v502 = vadd.f32 %v305, %v501
        %v503 = vpop.f32.mrb[0].mxu0
        %504 = vdwg.mxu0
        %v505 = vmax.f32 %v427, 0.0
        %v506 = vmax.f32 %v432, 0.0
        %v507 = vmax.f32 %v437, 0.0
        %v508 = vmax.f32 %v442, 0.0
        %v509 = vmax.f32 %v447, 0.0
        %v510 = vmax.f32 %v452, 0.0
        %v511 = vmax.f32 %v457, 0.0
        %v512 = vmax.f32 %v462, 0.0
        %v513 = vmax.f32 %v467, 0.0
        %v514 = vmax.f32 %v472, 0.0
        %v515 = vmax.f32 %v477, 0.0
        %v516 = vmax.f32 %v482, 0.0
        %v517 = vmax.f32 %v487, 0.0
        %v518 = vmax.f32 %v492, 0.0
        %v519 = vmax.f32 %v497, 0.0
        %v520 = vmax.f32 %v502, 0.0
        %v521 = vld [vmem:[%s3] sm:$0xff]
        %v522 = vld [vmem:[%s3 + $0x8] sm:$0xff]
        %v523 = vld [vmem:[%s3 + $0x10] sm:$0xff]
        %v524 = vld [vmem:[%s3 + $0x18] sm:$0xff]
        %v525 = vld [vmem:[%s3 + $0x20] sm:$0xff]
        %v526 = vld [vmem:[%s3 + $0x28] sm:$0xff]
        %v527 = vld [vmem:[%s3 + $0x30] sm:$0xff]
        %v528 = vld [vmem:[%s3 + $0x38] sm:$0xff]
        %v529 = vld [vmem:[%s3 + $0x40] sm:$0xff]
        %v530 = vld [vmem:[%s3 + $0x48] sm:$0xff]
        %v531 = vld [vmem:[%s3 + $0x50] sm:$0xff]
        %v532 = vld [vmem:[%s3 + $0x58] sm:$0xff]
        %v533 = vld [vmem:[%s3 + $0x60] sm:$0xff]
        %v534 = vld [vmem:[%s3 + $0x68] sm:$0xff]
        %v535 = vld [vmem:[%s3 + $0x70] sm:$0xff]
        %v536 = vld [vmem:[%s3 + $0x78] sm:$0xff]
        %v537 = vld [vmem:[%s4] sm:$0x1]
        %v539 = vlaneseq
        %v540 = vshrl.u32 %v539, 7
        %v541 = vsub.s32 0, %v540
        %v542 = vrot.slane %v537, %v541
        %544 = vmatprep.subr.mxu0 0.0
        %545 = vmatpush1.msra.mxu0 %v521
        %546 = vmatprep.subr.mxu0 0.0
        %547 = vmatpush1.msra.mxu0 %v522
        %548 = vmatprep.subr.mxu0 0.0
        %549 = vmatpush1.msra.mxu0 %v523
        %550 = vmatprep.subr.mxu0 0.0
        %551 = vmatpush1.msra.mxu0 %v524
        %552 = vmatprep.subr.mxu0 0.0
        %553 = vmatpush1.msra.mxu0 %v525
        %554 = vmatprep.subr.mxu0 0.0
        %555 = vmatpush1.msra.mxu0 %v526
        %556 = vmatprep.subr.mxu0 0.0
        %557 = vmatpush1.msra.mxu0 %v527
        %558 = vmatprep.subr.mxu0 0.0
        %559 = vmatpush1.msra.mxu0 %v528
        %560 = vmatprep.subr.mxu0 0.0
        %561 = vmatpush1.msra.mxu0 %v529
        %562 = vmatprep.subr.mxu0 0.0
        %563 = vmatpush1.msra.mxu0 %v530
        %564 = vmatprep.subr.mxu0 0.0
        %565 = vmatpush1.msra.mxu0 %v531
        %566 = vmatprep.subr.mxu0 0.0
        %567 = vmatpush1.msra.mxu0 %v532
        %568 = vmatprep.subr.mxu0 0.0
        %569 = vmatpush1.msra.mxu0 %v533
        %570 = vmatprep.subr.mxu0 0.0
        %571 = vmatpush1.msra.mxu0 %v534
        %572 = vmatprep.subr.mxu0 0.0
        %573 = vmatpush1.msra.mxu0 %v535
        %574 = vmatprep.subr.mxu0 0.0
        %575 = vmatpush1.msra.mxu0 %v536
        %576 = vmatprep.subr.mxu0 0.0
        %577 = vmatpush1.msra.mxu0 0.0
        %578 = vmatprep.subr.mxu0 0.0
        %579 = vmatpush1.msra.mxu0 0.0
        %580 = vmatprep.subr.mxu0 0.0
        %581 = vmatpush1.msra.mxu0 0.0
        %582 = vmatprep.subr.mxu0 0.0
        %583 = vmatpush1.msra.mxu0 0.0
        %584 = vmatprep.subr.mxu0 0.0
        %585 = vmatpush1.msra.mxu0 0.0
        %586 = vmatprep.subr.mxu0 0.0
        %587 = vmatpush1.msra.mxu0 0.0
        %588 = vmatprep.subr.mxu0 0.0
        %589 = vmatpush1.msra.mxu0 0.0
        %590 = vmatprep.subr.mxu0 0.0
        %591 = vmatpush1.msra.mxu0 0.0
        %592 = vmatprep.subr.mxu0 0.0
        %593 = vmatpush1.msra.mxu0 0.0
        %594 = vmatprep.subr.mxu0 0.0
        %595 = vmatpush1.msra.mxu0 0.0
        %596 = vmatprep.subr.mxu0 0.0
        %597 = vmatpush1.msra.mxu0 0.0
        %598 = vmatprep.subr.mxu0 0.0
        %599 = vmatpush1.msra.mxu0 0.0
        %600 = vmatprep.subr.mxu0 0.0
        %601 = vmatpush1.msra.mxu0 0.0
        %602 = vmatprep.subr.mxu0 0.0
        %603 = vmatpush1.msra.mxu0 0.0
        %604 = vmatprep.subr.mxu0 0.0
        %605 = vmatpush1.msra.mxu0 0.0
        %606 = vmatprep.subr.mxu0 0.0
        %607 = vmatpush1.msra.mxu0 0.0
        %608 = vmatprep.mubr.f32.mxu0 0.0
        %609 = vmatmul.mubr.f32.gmra.mrb[0].mxu0 %v505
        %v610 = vpop.f32.mrb[0].mxu0
        %v611 = vadd.f32 %v542, %v610
        %v612 = vpop.f32.mrb[0].mxu0
        %613 = vmatprep.mubr.f32.mxu0 0.0
        %614 = vmatmul.mubr.f32.gmra.mrb[0].mxu0 %v506
        %v615 = vpop.f32.mrb[0].mxu0
        %v616 = vadd.f32 %v542, %v615
        %v617 = vpop.f32.mrb[0].mxu0
        %618 = vmatprep.mubr.f32.mxu0 0.0
        %619 = vmatmul.mubr.f32.gmra.mrb[0].mxu0 %v507
        %v620 = vpop.f32.mrb[0].mxu0
        %v621 = vadd.f32 %v542, %v620
        %v622 = vpop.f32.mrb[0].mxu0
        %623 = vmatprep.mubr.f32.mxu0 0.0
        %624 = vmatmul.mubr.f32.gmra.mrb[0].mxu0 %v508
        %v625 = vpop.f32.mrb[0].mxu0
        %v626 = vadd.f32 %v542, %v625
        %v627 = vpop.f32.mrb[0].mxu0
        %628 = vmatprep.mubr.f32.mxu0 0.0
        %629 = vmatmul.mubr.f32.gmra.mrb[0].mxu0 %v509
        %v630 = vpop.f32.mrb[0].mxu0
        %v631 = vadd.f32 %v542, %v630
        %v632 = vpop.f32.mrb[0].mxu0
        %633 = vmatprep.mubr.f32.mxu0 0.0
        %634 = vmatmul.mubr.f32.gmra.mrb[0].mxu0 %v510
        %v635 = vpop.f32.mrb[0].mxu0
        %v636 = vadd.f32 %v542, %v635
        %v637 = vpop.f32.mrb[0].mxu0
        %638 = vmatprep.mubr.f32.mxu0 0.0
        %639 = vmatmul.mubr.f32.gmra.mrb[0].mxu0 %v511
        %v640 = vpop.f32.mrb[0].mxu0
        %v641 = vadd.f32 %v542, %v640
        %v642 = vpop.f32.mrb[0].mxu0
        %643 = vmatprep.mubr.f32.mxu0 0.0
        %644 = vmatmul.mubr.f32.gmra.mrb[0].mxu0 %v512
        %v645 = vpop.f32.mrb[0].mxu0
        %v646 = vadd.f32 %v542, %v645
        %v647 = vpop.f32.mrb[0].mxu0
        %648 = vmatprep.mubr.f32.mxu0 0.0
        %649 = vmatmul.mubr.f32.gmra.mrb[0].mxu0 %v513
        %v650 = vpop.f32.mrb[0].mxu0
        %v651 = vadd.f32 %v542, %v650
        %v652 = vpop.f32.mrb[0].mxu0
        %653 = vmatprep.mubr.f32.mxu0 0.0
        %654 = vmatmul.mubr.f32.gmra.mrb[0].mxu0 %v514
        %v655 = vpop.f32.mrb[0].mxu0
        %v656 = vadd.f32 %v542, %v655
        %v657 = vpop.f32.mrb[0].mxu0
        %658 = vmatprep.mubr.f32.mxu0 0.0
        %659 = vmatmul.mubr.f32.gmra.mrb[0].mxu0 %v515
        %v660 = vpop.f32.mrb[0].mxu0
        %v661 = vadd.f32 %v542, %v660
        %v662 = vpop.f32.mrb[0].mxu0
        %663 = vmatprep.mubr.f32.mxu0 0.0
        %664 = vmatmul.mubr.f32.gmra.mrb[0].mxu0 %v516
        %v665 = vpop.f32.mrb[0].mxu0
        %v666 = vadd.f32 %v542, %v665
        %v667 = vpop.f32.mrb[0].mxu0
        %668 = vmatprep.mubr.f32.mxu0 0.0
        %669 = vmatmul.mubr.f32.gmra.mrb[0].mxu0 %v517
        %v670 = vpop.f32.mrb[0].mxu0
        %v671 = vadd.f32 %v542, %v670
        %v672 = vpop.f32.mrb[0].mxu0
        %673 = vmatprep.mubr.f32.mxu0 0.0
        %674 = vmatmul.mubr.f32.gmra.mrb[0].mxu0 %v518
        %v675 = vpop.f32.mrb[0].mxu0
        %v676 = vadd.f32 %v542, %v675
        %v677 = vpop.f32.mrb[0].mxu0
        %678 = vmatprep.mubr.f32.mxu0 0.0
        %679 = vmatmul.mubr.f32.gmra.mrb[0].mxu0 %v519
        %v680 = vpop.f32.mrb[0].mxu0
        %v681 = vadd.f32 %v542, %v680
        %v682 = vpop.f32.mrb[0].mxu0
        %683 = vmatprep.mubr.f32.mxu0 0.0
        %684 = vmatmul.mubr.f32.gmra.mrb[0].mxu0 %v520
        %v685 = vpop.f32.mrb[0].mxu0
        %v686 = vadd.f32 %v542, %v685
        %v687 = vpop.f32.mrb[0].mxu0
        %688 = vdwg.mxu0
        %v689 = vmax.f32 %v611, 0.0
        %v690 = vmax.f32 %v616, 0.0
        %v691 = vmax.f32 %v621, 0.0
        %v692 = vmax.f32 %v626, 0.0
        %v693 = vmax.f32 %v631, 0.0
        %v694 = vmax.f32 %v636, 0.0
        %v695 = vmax.f32 %v641, 0.0
        %v696 = vmax.f32 %v646, 0.0
        %v697 = vmax.f32 %v651, 0.0
        %v698 = vmax.f32 %v656, 0.0
        %v699 = vmax.f32 %v661, 0.0
        %v700 = vmax.f32 %v666, 0.0
        %v701 = vmax.f32 %v671, 0.0
        %v702 = vmax.f32 %v676, 0.0
        %v703 = vmax.f32 %v681, 0.0
        %v704 = vmax.f32 %v686, 0.0
        %v705 = vld [vmem:[%s5] sm:$0xff]
        %v706 = vld [vmem:[%s5 + $0x8] sm:$0xff]
        %v707 = vld [vmem:[%s5 + $0x10] sm:$0xff]
        %v708 = vld [vmem:[%s5 + $0x18] sm:$0xff]
        %v709 = vld [vmem:[%s5 + $0x20] sm:$0xff]
        %v710 = vld [vmem:[%s5 + $0x28] sm:$0xff]
        %v711 = vld [vmem:[%s5 + $0x30] sm:$0xff]
        %v712 = vld [vmem:[%s5 + $0x38] sm:$0xff]
        %v713 = vld [vmem:[%s5 + $0x40] sm:$0xff]
        %v714 = vld [vmem:[%s5 + $0x48] sm:$0xff]
        %v715 = vld [vmem:[%s5 + $0x50] sm:$0xff]
        %v716 = vld [vmem:[%s5 + $0x58] sm:$0xff]
        %v717 = vld [vmem:[%s5 + $0x60] sm:$0xff]
        %v718 = vld [vmem:[%s5 + $0x68] sm:$0xff]
        %v719 = vld [vmem:[%s5 + $0x70] sm:$0xff]
        %v720 = vld [vmem:[%s5 + $0x78] sm:$0xff]
        %v721 = vld [vmem:[%s6] sm:$0x1]
        %v723 = vlaneseq
        %v724 = vshrl.u32 %v723, 7
        %v725 = vsub.s32 0, %v724
        %v726 = vrot.slane %v721, %v725
        %728 = vmatprep.subr.mxu0 0.0
        %729 = vmatpush1.msra.mxu0 %v705
        %730 = vmatprep.subr.mxu0 0.0
        %731 = vmatpush1.msra.mxu0 %v706
        %732 = vmatprep.subr.mxu0 0.0
        %733 = vmatpush1.msra.mxu0 %v707
        %734 = vmatprep.subr.mxu0 0.0
        %735 = vmatpush1.msra.mxu0 %v708
        %736 = vmatprep.subr.mxu0 0.0
        %737 = vmatpush1.msra.mxu0 %v709
        %738 = vmatprep.subr.mxu0 0.0
        %739 = vmatpush1.msra.mxu0 %v710
        %740 = vmatprep.subr.mxu0 0.0
        %741 = vmatpush1.msra.mxu0 %v711
        %742 = vmatprep.subr.mxu0 0.0
        %743 = vmatpush1.msra.mxu0 %v712
        %744 = vmatprep.subr.mxu0 0.0
        %745 = vmatpush1.msra.mxu0 %v713
        %746 = vmatprep.subr.mxu0 0.0
        %747 = vmatpush1.msra.mxu0 %v714
        %748 = vmatprep.subr.mxu0 0.0
        %749 = vmatpush1.msra.mxu0 %v715
        %750 = vmatprep.subr.mxu0 0.0
        %751 = vmatpush1.msra.mxu0 %v716
        %752 = vmatprep.subr.mxu0 0.0
        %753 = vmatpush1.msra.mxu0 %v717
        %754 = vmatprep.subr.mxu0 0.0
        %755 = vmatpush1.msra.mxu0 %v718
        %756 = vmatprep.subr.mxu0 0.0
        %757 = vmatpush1.msra.mxu0 %v719
        %758 = vmatprep.subr.mxu0 0.0
        %759 = vmatpush1.msra.mxu0 %v720
        %760 = vmatprep.subr.mxu0 0.0
        %761 = vmatpush1.msra.mxu0 0.0
        %762 = vmatprep.subr.mxu0 0.0
        %763 = vmatpush1.msra.mxu0 0.0
        %764 = vmatprep.subr.mxu0 0.0
        %765 = vmatpush1.msra.mxu0 0.0
        %766 = vmatprep.subr.mxu0 0.0
        %767 = vmatpush1.msra.mxu0 0.0
        %768 = vmatprep.subr.mxu0 0.0
        %769 = vmatpush1.msra.mxu0 0.0
        %770 = vmatprep.subr.mxu0 0.0
        %771 = vmatpush1.msra.mxu0 0.0
        %772 = vmatprep.subr.mxu0 0.0
        %773 = vmatpush1.msra.mxu0 0.0
        %774 = vmatprep.subr.mxu0 0.0
        %775 = vmatpush1.msra.mxu0 0.0
        %776 = vmatprep.subr.mxu0 0.0
        %777 = vmatpush1.msra.mxu0 0.0
        %778 = vmatprep.subr.mxu0 0.0
        %779 = vmatpush1.msra.mxu0 0.0
        %780 = vmatprep.subr.mxu0 0.0
        %781 = vmatpush1.msra.mxu0 0.0
        %782 = vmatprep.subr.mxu0 0.0
        %783 = vmatpush1.msra.mxu0 0.0
        %784 = vmatprep.subr.mxu0 0.0
        %785 = vmatpush1.msra.mxu0 0.0
        %786 = vmatprep.subr.mxu0 0.0
        %787 = vmatpush1.msra.mxu0 0.0
        %788 = vmatprep.subr.mxu0 0.0
        %789 = vmatpush1.msra.mxu0 0.0
        %790 = vmatprep.subr.mxu0 0.0
        %791 = vmatpush1.msra.mxu0 0.0
        %792 = vmatprep.mubr.f32.mxu0 0.0
        %793 = vmatmul.mubr.f32.gmra.mrb[0].mxu0 %v689
        %v794 = vpop.f32.mrb[0].mxu0
        %v795 = vadd.f32 %v726, %v794
        %v796 = vpop.f32.mrb[0].mxu0
        %797 = vmatprep.mubr.f32.mxu0 0.0
        %798 = vmatmul.mubr.f32.gmra.mrb[0].mxu0 %v690
        %v799 = vpop.f32.mrb[0].mxu0
        %v800 = vadd.f32 %v726, %v799
        %v801 = vpop.f32.mrb[0].mxu0
        %802 = vmatprep.mubr.f32.mxu0 0.0
        %803 = vmatmul.mubr.f32.gmra.mrb[0].mxu0 %v691
        %v804 = vpop.f32.mrb[0].mxu0
        %v805 = vadd.f32 %v726, %v804
        %v806 = vpop.f32.mrb[0].mxu0
        %807 = vmatprep.mubr.f32.mxu0 0.0
        %808 = vmatmul.mubr.f32.gmra.mrb[0].mxu0 %v692
        %v809 = vpop.f32.mrb[0].mxu0
        %v810 = vadd.f32 %v726, %v809
        %v811 = vpop.f32.mrb[0].mxu0
        %812 = vmatprep.mubr.f32.mxu0 0.0
        %813 = vmatmul.mubr.f32.gmra.mrb[0].mxu0 %v693
        %v814 = vpop.f32.mrb[0].mxu0
        %v815 = vadd.f32 %v726, %v814
        %v816 = vpop.f32.mrb[0].mxu0
        %817 = vmatprep.mubr.f32.mxu0 0.0
        %818 = vmatmul.mubr.f32.gmra.mrb[0].mxu0 %v694
        %v819 = vpop.f32.mrb[0].mxu0
        %v820 = vadd.f32 %v726, %v819
        %v821 = vpop.f32.mrb[0].mxu0
        %822 = vmatprep.mubr.f32.mxu0 0.0
        %823 = vmatmul.mubr.f32.gmra.mrb[0].mxu0 %v695
        %v824 = vpop.f32.mrb[0].mxu0
        %v825 = vadd.f32 %v726, %v824
        %v826 = vpop.f32.mrb[0].mxu0
        %827 = vmatprep.mubr.f32.mxu0 0.0
        %828 = vmatmul.mubr.f32.gmra.mrb[0].mxu0 %v696
        %v829 = vpop.f32.mrb[0].mxu0
        %v830 = vadd.f32 %v726, %v829
        %v831 = vpop.f32.mrb[0].mxu0
        %832 = vmatprep.mubr.f32.mxu0 0.0
        %833 = vmatmul.mubr.f32.gmra.mrb[0].mxu0 %v697
        %v834 = vpop.f32.mrb[0].mxu0
        %v835 = vadd.f32 %v726, %v834
        %v836 = vpop.f32.mrb[0].mxu0
        %837 = vmatprep.mubr.f32.mxu0 0.0
        %838 = vmatmul.mubr.f32.gmra.mrb[0].mxu0 %v698
        %v839 = vpop.f32.mrb[0].mxu0
        %v840 = vadd.f32 %v726, %v839
        %v841 = vpop.f32.mrb[0].mxu0
        %842 = vmatprep.mubr.f32.mxu0 0.0
        %843 = vmatmul.mubr.f32.gmra.mrb[0].mxu0 %v699
        %v844 = vpop.f32.mrb[0].mxu0
        %v845 = vadd.f32 %v726, %v844
        %v846 = vpop.f32.mrb[0].mxu0
        %847 = vmatprep.mubr.f32.mxu0 0.0
        %848 = vmatmul.mubr.f32.gmra.mrb[0].mxu0 %v700
        %v849 = vpop.f32.mrb[0].mxu0
        %v850 = vadd.f32 %v726, %v849
        %v851 = vpop.f32.mrb[0].mxu0
        %852 = vmatprep.mubr.f32.mxu0 0.0
        %853 = vmatmul.mubr.f32.gmra.mrb[0].mxu0 %v701
        %v854 = vpop.f32.mrb[0].mxu0
        %v855 = vadd.f32 %v726, %v854
        %v856 = vpop.f32.mrb[0].mxu0
        %857 = vmatprep.mubr.f32.mxu0 0.0
        %858 = vmatmul.mubr.f32.gmra.mrb[0].mxu0 %v702
        %v859 = vpop.f32.mrb[0].mxu0
        %v860 = vadd.f32 %v726, %v859
        %v861 = vpop.f32.mrb[0].mxu0
        %862 = vmatprep.mubr.f32.mxu0 0.0
        %863 = vmatmul.mubr.f32.gmra.mrb[0].mxu0 %v703
        %v864 = vpop.f32.mrb[0].mxu0
        %v865 = vadd.f32 %v726, %v864
        %v866 = vpop.f32.mrb[0].mxu0
        %867 = vmatprep.mubr.f32.mxu0 0.0
        %868 = vmatmul.mubr.f32.gmra.mrb[0].mxu0 %v704
        %v869 = vpop.f32.mrb[0].mxu0
        %v870 = vadd.f32 %v726, %v869
        %v871 = vpop.f32.mrb[0].mxu0
        %872 = vdwg.mxu0
        %v873 = vxor.u32 %v795, 2147483648
        %v874 = vxor.u32 %v800, 2147483648
        %v875 = vxor.u32 %v805, 2147483648
        %v876 = vxor.u32 %v810, 2147483648
        %v877 = vxor.u32 %v815, 2147483648
        %v878 = vxor.u32 %v820, 2147483648
        %v879 = vxor.u32 %v825, 2147483648
        %v880 = vxor.u32 %v830, 2147483648
        %v881 = vxor.u32 %v835, 2147483648
        %v882 = vxor.u32 %v840, 2147483648
        %v883 = vxor.u32 %v845, 2147483648
        %v884 = vxor.u32 %v850, 2147483648
        %v885 = vxor.u32 %v855, 2147483648
        %v886 = vxor.u32 %v860, 2147483648
        %v887 = vxor.u32 %v865, 2147483648
        %v888 = vxor.u32 %v870, 2147483648
        %v889 = vmul.f32 %v873, 1.442695
        %v890 = vpow.pop %v889
        %v891 = vmul.f32 %v874, 1.442695
        %v892 = vpow.pop %v891
        %v893 = vmul.f32 %v875, 1.442695
        %v894 = vpow.pop %v893
        %v895 = vmul.f32 %v876, 1.442695
        %v896 = vpow.pop %v895
        %v897 = vmul.f32 %v877, 1.442695
        %v898 = vpow.pop %v897
        %v899 = vmul.f32 %v878, 1.442695
        %v900 = vpow.pop %v899
        %v901 = vmul.f32 %v879, 1.442695
        %v902 = vpow.pop %v901
        %v903 = vmul.f32 %v880, 1.442695
        %v904 = vpow.pop %v903
        %v905 = vmul.f32 %v881, 1.442695
        %v906 = vpow.pop %v905
        %v907 = vmul.f32 %v882, 1.442695
        %v908 = vpow.pop %v907
        %v909 = vmul.f32 %v883, 1.442695
        %v910 = vpow.pop %v909
        %v911 = vmul.f32 %v884, 1.442695
        %v912 = vpow.pop %v911
        %v913 = vmul.f32 %v885, 1.442695
        %v914 = vpow.pop %v913
        %v915 = vmul.f32 %v886, 1.442695
        %v916 = vpow.pop %v915
        %v917 = vmul.f32 %v887, 1.442695
        %v918 = vpow.pop %v917
        %v919 = vmul.f32 %v888, 1.442695
        %v920 = vpow.pop %v919
        %v921 = vadd.f32 %v890, 1.0
        %v922 = vadd.f32 %v892, 1.0
        %v923 = vadd.f32 %v894, 1.0
        %v924 = vadd.f32 %v896, 1.0
        %v925 = vadd.f32 %v898, 1.0
        %v926 = vadd.f32 %v900, 1.0
        %v927 = vadd.f32 %v902, 1.0
        %v928 = vadd.f32 %v904, 1.0
        %v929 = vadd.f32 %v906, 1.0
        %v930 = vadd.f32 %v908, 1.0
        %v931 = vadd.f32 %v910, 1.0
        %v932 = vadd.f32 %v912, 1.0
        %v933 = vadd.f32 %v914, 1.0
        %v934 = vadd.f32 %v916, 1.0
        %v935 = vadd.f32 %v918, 1.0
        %v936 = vadd.f32 %v920, 1.0
        %v937 = vrcp.pop %v921
        %v938 = vmul.f32 1.0, %v937
        %v939 = vrcp.pop %v922
        %v940 = vmul.f32 1.0, %v939
        %v941 = vrcp.pop %v923
        %v942 = vmul.f32 1.0, %v941
        %v943 = vrcp.pop %v924
        %v944 = vmul.f32 1.0, %v943
        %v945 = vrcp.pop %v925
        %v946 = vmul.f32 1.0, %v945
        %v947 = vrcp.pop %v926
        %v948 = vmul.f32 1.0, %v947
        %v949 = vrcp.pop %v927
        %v950 = vmul.f32 1.0, %v949
        %v951 = vrcp.pop %v928
        %v952 = vmul.f32 1.0, %v951
        %v953 = vrcp.pop %v929
        %v954 = vmul.f32 1.0, %v953
        %v955 = vrcp.pop %v930
        %v956 = vmul.f32 1.0, %v955
        %v957 = vrcp.pop %v931
        %v958 = vmul.f32 1.0, %v957
        %v959 = vrcp.pop %v932
        %v960 = vmul.f32 1.0, %v959
        %v961 = vrcp.pop %v933
        %v962 = vmul.f32 1.0, %v961
        %v963 = vrcp.pop %v934
        %v964 = vmul.f32 1.0, %v963
        %v965 = vrcp.pop %v935
        %v966 = vmul.f32 1.0, %v965
        %v967 = vrcp.pop %v936
        %v968 = vmul.f32 1.0, %v967
        %969 = vst [vmem:[%s272] sm:$0xff] %v938
        %970 = vst [vmem:[%s272 + $0x8] sm:$0xff] %v940
        %971 = vst [vmem:[%s272 + $0x10] sm:$0xff] %v942
        %972 = vst [vmem:[%s272 + $0x18] sm:$0xff] %v944
        %973 = vst [vmem:[%s272 + $0x20] sm:$0xff] %v946
        %974 = vst [vmem:[%s272 + $0x28] sm:$0xff] %v948
        %975 = vst [vmem:[%s272 + $0x30] sm:$0xff] %v950
        %976 = vst [vmem:[%s272 + $0x38] sm:$0xff] %v952
        %977 = vst [vmem:[%s272 + $0x40] sm:$0xff] %v954
        %978 = vst [vmem:[%s272 + $0x48] sm:$0xff] %v956
        %979 = vst [vmem:[%s272 + $0x50] sm:$0xff] %v958
        %980 = vst [vmem:[%s272 + $0x58] sm:$0xff] %v960
        %981 = vst [vmem:[%s272 + $0x60] sm:$0xff] %v962
        %982 = vst [vmem:[%s272 + $0x68] sm:$0xff] %v964
        %983 = vst [vmem:[%s272 + $0x70] sm:$0xff] %v966
        %984 = vst [vmem:[%s272 + $0x78] sm:$0xff] %v968
        %s985 = sand.u32 %s181, 1
        %s986 = scalar_lea.sflag [#allocation3], %s985
        %s987 = sand.u32 %s181, 1
        %s988 = smul.addr %s987, 128
        %s989 = scalar_lea.vmem [#allocation2], %s988
        // Predicated region
        $region49: #{tpu_custom_call.1} parent=47 // pred_check
          %p990 = pneg %p191
        $region50: #{tpu_custom_call.1} parent=47 // pred_check_branch
          %992 = sbr.rel (%p990) target = $region52
        $region51: #{tpu_custom_call.1} parent=47 // pred_region
          %s993 = smul.u32 16, %s21
          %s995 = ssub.s32 2048, 2048
          %996 = vsyncadd %s986, %s995
          %s997 = smul.addr %s993, 128
          %s998 = scalar_lea.hbm %s7, %s997
          %s999 = sshll.u32 %s989, 4
          %s1000 = int_to_ptr.vmem [resolvable:$true] %s999
          %1005 = dma.vmem_to_hbm [thread:$0]  %s1000, 2048, %s998, %s986, 128, 128, 8
        $region52: #{tpu_custom_call.1} parent=47 // pred_fallthru
          _
      $region48: #{tpu_custom_call.1} parent=5 // pred_fallthru
        _
      %p1006 = scmp.le.s32.totalorder 2, %s16
      // Predicated region
      $region53: #{tpu_custom_call.1} parent=5 // pred_check
        %p1007 = pneg %p1006
      $region54: #{tpu_custom_call.1} parent=5 // pred_check_branch
        %1009 = sbr.rel (%p1007) target = $region56
      $region55: #{tpu_custom_call.1} parent=5 // pred_region
        %s1010 = ssub.s32 %s16, 2
        // Predicated region
        $region57: #{tpu_custom_call.1} parent=55 // pred_check
          %p1011 = pneg %p197
        $region58: #{tpu_custom_call.1} parent=55 // pred_check_branch
          %1013 = sbr.rel (%p1011) target = $region60
        $region59: #{tpu_custom_call.1} parent=55 // pred_region
          %s1014 = sand.u32 %s182, 1
          %s1015 = scalar_lea.sflag [#allocation3], %s1014
          %s1016 = sand.u32 %s182, 1
          %s1017 = smul.addr %s1016, 128
          %s1018 = scalar_lea.vmem [#allocation2], %s1017
          %1019 = dma.done %s1015, 2048
        $region60: #{tpu_custom_call.1} parent=55 // pred_fallthru
          _
      $region56: #{tpu_custom_call.1} parent=5 // pred_fallthru
        _
    $region6: #{tpu_custom_call.1} parent=1 // loop_footer
      %s20 = sadd.s32 1, %s16
    $region7: #{tpu_custom_call.1} parent=1 // loop_footer_branch
      %15 = sbr.rel target = $region3
    $region8: #{tpu_custom_call.1} parent=1 // loop_exit
      _
    %1020 = vsyncpa [#allocation3], 1
    %s1021 = scalar_lea.sflag [#allocation3], 1
    %1022 = vsyncpa %s1021, 1

</llo_original>
